<compile_context>
chip_gen: v6e
topology: v6e:2x2x1
jax: 0.10.0
libtpu: 0.0.40
codegen_flags: <defaults>
</compile_context>

<pallas_src>
import jax
import jax.numpy as jnp
from jax.experimental import pallas as pl
from jax.experimental.pallas import tpu as pltpu


def _mlp_kernel(x_ref,
                w0_ref, b0_ref,
                w1_ref, b1_ref,
                w2_ref, b2_ref,
                w3_ref, b3_ref,
                o_ref):
    """Full MLP forward for one batch tile, entirely in VMEM.

    x_ref : (bt, v)  natural feature-last tile straight from HBM.
    w_l   : (out_l, in_l)  PyTorch nn.Linear layout.
    b_l   : (out_l, 1)  f32 columns (broadcast over the lane/batch axis).
    o_ref : (1, bt)  lane-dense output row.

    The first matmul contracts the feature axis of both operands so all
    intermediates are (h, bt): batch is the lane (fast) axis from then on.
    """
    x = x_ref[...]                                            # (bt, v)
    # W0 (h0, v) x x (bt, v) contracted on v  ->  (h0, bt)   (a @ b.T pattern)
    h = jax.lax.dot_general(
        w0_ref[...], x,
        dimension_numbers=(((1,), (1,)), ((), ())),
        preferred_element_type=jnp.float32,
    ) + b0_ref[...]
    h = jnp.maximum(h, 0.0).astype(w1_ref.dtype)              # (h0, bt)

    h = jnp.dot(w1_ref[...], h,
                preferred_element_type=jnp.float32) + b1_ref[...]
    h = jnp.maximum(h, 0.0).astype(w2_ref.dtype)              # (h1, bt)

    h = jnp.dot(w2_ref[...], h,
                preferred_element_type=jnp.float32) + b2_ref[...]
    h = jnp.maximum(h, 0.0).astype(w3_ref.dtype)              # (h2, bt)

    out = jnp.dot(w3_ref[...], h,
                  preferred_element_type=jnp.float32) + b3_ref[...]   # (1, bt)
    o_ref[...] = out.astype(o_ref.dtype)


def _round_up(x, m):
    return -(-x // m) * m


def _num_tensorcores():
    """Best-effort TensorCores per device (2 on v7x-style chips, else 1)."""
    try:
        dev = jax.devices()[0]
        for attr in ("num_cores", "core_count"):
            n = getattr(dev, attr, None)
            if isinstance(n, int) and n > 0:
                return n
        return 1
    except Exception:
        return 1


def _choose_tiling(B, num_tensorcores, max_batch_tile):
    """Return (batch_tile, num_tiles, padded_B).

    Single-TC chips (v5e/v6e): the grid is a serial loop, so a single step
    covering the whole batch is cheapest (~0.35us saved per step removed);
    only tile when B exceeds the max tile.  Two-TC chips (v7x): an even number
    of lane-aligned steps so neither TensorCore idles on the last step.
    """
    max_batch_tile = max(128, _round_up(max_batch_tile, 128))
    multi = num_tensorcores > 1 and B >= 256
    if not multi and B <= max_batch_tile:
        return B, 1, B                      # one step, no padding ever
    nt = -(-B // max_batch_tile)
    if multi:
        nt = max(2, nt + (nt % 2))          # even step count for 2 TCs
    bt = _round_up(-(-B // nt), 128)        # lane-aligned, minimal padding
    return bt, nt, nt * bt


def wass_nn_forward(x, params, *, batch_tile=None, num_tensorcores=None,
                    max_batch_tile=4096):
    """Pallas forward pass of WassNNClassifier.reseau.

    x:      (B, v) feature-last, f32 or bf16 — used as-is (no wrapper cast/copy).
    params: [(W_l, b_l)] in PyTorch nn.Linear layout; W_l (out_l, in_l), b_l (out_l,).
    Returns (B, 1) float32 scores.
    """
    assert len(params) == 4, "kernel specialized to 3 hidden layers + output head"
    B, v = x.shape
    wd = x.dtype
    # Weights are tiny: casting them (not x) to x's dtype keeps HBM traffic on x
    # at exactly one read.  Biases stay f32 (they add into f32 accumulators).
    w0, w1, w2, w3 = (jnp.asarray(w).astype(wd) for (w, _) in params)
    b0, b1, b2, b3 = (jnp.asarray(b).reshape(-1, 1).astype(jnp.float32)
                      for (_, b) in params)
    h0, h1, h2 = w0.shape[0], w1.shape[0], w2.shape[0]
    assert w0.shape[1] == v and w1.shape[1] == h0 and w2.shape[1] == h1
    assert w3.shape == (1, h2)

    if num_tensorcores is None:
        num_tensorcores = _num_tensorcores()
    if batch_tile is None:
        batch_tile, num_tiles, B_pad = _choose_tiling(B, num_tensorcores,
                                                      max_batch_tile)
    else:
        num_tiles = -(-B // batch_tile)
        B_pad = num_tiles * batch_tile

    xq = x
    if B_pad != B:
        # Ragged tail only; the auto tiler avoids this whenever it can because a
        # pad is an extra HBM pass over x.
        xq = jnp.pad(x, ((0, B_pad - B), (0, 0)))

    def _const(arr):
        # Whole (small) parameter array resident every step; constant index_map
        # means Pallas never re-DMAs it.
        return pl.BlockSpec(arr.shape, lambda i: (0, 0))

    in_specs = [
        pl.BlockSpec((batch_tile, v), lambda i: (i, 0)),    # x tile, natural layout
        _const(w0), _const(b0),
        _const(w1), _const(b1),
        _const(w2), _const(b2),
        _const(w3), _const(b3),
    ]
    # Lane-dense output: each step writes a (1, batch_tile) row of (1, B_pad).
    out_specs = pl.BlockSpec((1, batch_tile), lambda i: (0, i))

    param_arrays = (w0, b0, w1, b1, w2, b2, w3, b3)
    cost = pl.CostEstimate(
        flops=2 * B_pad * (v * h0 + h0 * h1 + h1 * h2 + h2),
        transcendentals=0,
        bytes_accessed=int(
            xq.size * xq.dtype.itemsize
            + sum(a.size * a.dtype.itemsize for a in param_arrays)
            + B_pad * 4),
    )

    out = pl.pallas_call(
        _mlp_kernel,
        out_shape=jax.ShapeDtypeStruct((1, B_pad), jnp.float32),
        grid_spec=pltpu.PrefetchScalarGridSpec(
            num_scalar_prefetch=0,
            grid=(num_tiles,),
            in_specs=in_specs,
            out_specs=out_specs,
        ),
        compiler_params=pltpu.CompilerParams(
            dimension_semantics=("parallel",),
        ),
        cost_estimate=cost,
    )(xq, w0, b0, w1, b1, w2, b2, w3, b3)

    # (1, B_pad) row-major -> (B_pad, 1), drop padded rows.
    return out.reshape(B_pad, 1)[:B]


def init_params(key, v, hidden_layer_sizes):
    """PyTorch nn.Linear default init: W (out, in), b (out, 1), U(-1/sqrt(in), 1/sqrt(in))."""
    sizes = [v] + list(hidden_layer_sizes) + [1]
    params = []
    for fan_in, fan_out in zip(sizes[:-1], sizes[1:]):
        key, kw, kb = jax.random.split(key, 3)
        bound = 1.0 / (float(fan_in) ** 0.5)
        w = jax.random.uniform(kw, (fan_out, fan_in), jnp.float32, -bound, bound)
        b = jax.random.uniform(kb, (fan_out, 1), jnp.float32, -bound, bound)
        params.append((w, b))
    return params


def reference_forward(x, params):
    h = x
    for i, (w, b) in enumerate(params):
        h = h @ w.T + b.reshape(1, -1)
        if i < len(params) - 1:
            h = jnp.maximum(h, 0.0)
    return h


if __name__ == "__main__":
    # Shapes consistent with the module: x is a (batch, v) feature matrix.
    B, v = 512, 16
    hidden_layer_sizes = (32, 32, 32)

    key = jax.random.PRNGKey(0)
    kx, kp = jax.random.split(key)
    x = jax.random.normal(kx, (B, v), jnp.float32)
    params = init_params(kp, v, hidden_layer_sizes)
    ref = reference_forward(x, params)

    # Default path: auto tiling (single grid step on 1-TC chips, even split on v7x).
    out = jax.block_until_ready(wass_nn_forward(x, params))
    assert out.shape == (B, 1)
    assert jnp.allclose(out, ref, atol=1e-5, rtol=1e-5), "mismatch (default)"

    # Explicit multi-step tiling: exercises the grid loop + lane-dense stores.
    out_t = jax.block_until_ready(wass_nn_forward(x, params, batch_tile=128))
    assert jnp.allclose(out_t, ref, atol=1e-5, rtol=1e-5), "mismatch (tiled)"

    # v7x-style 2-TensorCore tiling on a ragged batch (even step count, pad+slice).
    out_2tc = jax.block_until_ready(
        wass_nn_forward(x[:500], params, num_tensorcores=2))
    assert jnp.allclose(out_2tc, ref[:500], atol=1e-5, rtol=1e-5), "mismatch (2TC)"

    # bf16 ingest: caller supplies bf16 x directly (no wrapper cast pass);
    # weights are cast (tiny), accumulation stays f32.
    out_bf16 = jax.block_until_ready(
        wass_nn_forward(x.astype(jnp.bfloat16), params))
    assert jnp.allclose(out_bf16, ref, atol=5e-2, rtol=5e-2), "mismatch (bf16)"

    # Small ragged batch: single full-batch block, no padding.
    out_small = jax.block_until_ready(wass_nn_forward(x[:16], params))
    assert jnp.allclose(out_small, ref[:16], atol=1e-5, rtol=1e-5), "mismatch (small)"

    # TODO(synk): fit() (WGAN-GP gradient-penalty training with Adam/SGD/LBFGS),
    # seuil()/predict() thresholding and score() are host-side training/eval logic,
    # not part of forward(); they are intentionally not implemented as kernels.
    print("KERNEL_OK")
</pallas_src>

<mosaic_0001>
module attributes {stable_mosaic.version = 11 : i64} {
  func.func @_mlp_kernel(%arg0: i32, %arg1: memref<512x16xf32, #tpu.memory_space<vmem>>, %arg2: memref<32x16xf32, #tpu.memory_space<vmem>>, %arg3: memref<32x1xf32, #tpu.memory_space<vmem>>, %arg4: memref<32x32xf32, #tpu.memory_space<vmem>>, %arg5: memref<32x1xf32, #tpu.memory_space<vmem>>, %arg6: memref<32x32xf32, #tpu.memory_space<vmem>>, %arg7: memref<32x1xf32, #tpu.memory_space<vmem>>, %arg8: memref<1x32xf32, #tpu.memory_space<vmem>>, %arg9: memref<1x1xf32, #tpu.memory_space<vmem>>, %arg10: memref<1x512xf32, #tpu.memory_space<vmem>>) attributes {dimension_semantics = [#tpu.dimension_semantics<parallel>], iteration_bounds = array<i64: 1>, scalar_prefetch = 0 : i64, scratch_operands = 0 : i64, tpu.core_type = #tpu.core_type<tc>, window_params = [{transform_indices = @transform_0, window_bounds = array<i64: 512, 16>}, {pipeline_mode = #tpu.pipeline_mode<synchronous>, transform_indices = @transform_1, window_bounds = array<i64: 32, 16>}, {pipeline_mode = #tpu.pipeline_mode<synchronous>, transform_indices = @transform_2, window_bounds = array<i64: 32, 1>}, {pipeline_mode = #tpu.pipeline_mode<synchronous>, transform_indices = @transform_3, window_bounds = array<i64: 32, 32>}, {pipeline_mode = #tpu.pipeline_mode<synchronous>, transform_indices = @transform_4, window_bounds = array<i64: 32, 1>}, {pipeline_mode = #tpu.pipeline_mode<synchronous>, transform_indices = @transform_5, window_bounds = array<i64: 32, 32>}, {pipeline_mode = #tpu.pipeline_mode<synchronous>, transform_indices = @transform_6, window_bounds = array<i64: 32, 1>}, {pipeline_mode = #tpu.pipeline_mode<synchronous>, transform_indices = @transform_7, window_bounds = array<i64: 1, 32>}, {pipeline_mode = #tpu.pipeline_mode<synchronous>, transform_indices = @transform_8, window_bounds = array<i64: 1, 1>}, {transform_indices = @transform_9, window_bounds = array<i64: 1, 512>}]} {
    %c0 = arith.constant 0 : index
    %c0_0 = arith.constant 0 : index
    %0 = vector.load %arg1[%c0, %c0_0] : memref<512x16xf32, #tpu.memory_space<vmem>>, vector<512x16xf32>
    %c0_1 = arith.constant 0 : index
    %c0_2 = arith.constant 0 : index
    %1 = vector.load %arg2[%c0_1, %c0_2] : memref<32x16xf32, #tpu.memory_space<vmem>>, vector<32x16xf32>
    %cst = arith.constant dense<0.000000e+00> : vector<32x512xf32>
    %2 = tpu.matmul %1, %0, %cst {dimension_numbers = #tpu.dot_dimension_numbers<[1], [1], [0], [0], [0, 0, 1, 0], [], []>} : vector<32x16xf32>, vector<512x16xf32>, vector<32x512xf32> -> vector<32x512xf32>
    %c0_3 = arith.constant 0 : index
    %c0_4 = arith.constant 0 : index
    %3 = vector.load %arg3[%c0_3, %c0_4] : memref<32x1xf32, #tpu.memory_space<vmem>>, vector<32x1xf32>
    %4 = vector.broadcast %3 : vector<32x1xf32> to vector<32x512xf32>
    %5 = arith.addf %2, %4 : vector<32x512xf32>
    %cst_5 = arith.constant 0.000000e+00 : f32
    %6 = vector.broadcast %cst_5 : f32 to vector<32x512xf32>
    %7 = arith.maximumf %5, %6 : vector<32x512xf32>
    %c0_6 = arith.constant 0 : index
    %c0_7 = arith.constant 0 : index
    %8 = vector.load %arg4[%c0_6, %c0_7] : memref<32x32xf32, #tpu.memory_space<vmem>>, vector<32x32xf32>
    %cst_8 = arith.constant dense<0.000000e+00> : vector<32x512xf32>
    %9 = tpu.matmul %8, %7, %cst_8 {dimension_numbers = #tpu.dot_dimension_numbers<[1], [0], [0], [1], [0, 0, 1, 1], [], []>} : vector<32x32xf32>, vector<32x512xf32>, vector<32x512xf32> -> vector<32x512xf32>
    %c0_9 = arith.constant 0 : index
    %c0_10 = arith.constant 0 : index
    %10 = vector.load %arg5[%c0_9, %c0_10] : memref<32x1xf32, #tpu.memory_space<vmem>>, vector<32x1xf32>
    %11 = vector.broadcast %10 : vector<32x1xf32> to vector<32x512xf32>
    %12 = arith.addf %9, %11 : vector<32x512xf32>
    %cst_11 = arith.constant 0.000000e+00 : f32
    %13 = vector.broadcast %cst_11 : f32 to vector<32x512xf32>
    %14 = arith.maximumf %12, %13 : vector<32x512xf32>
    %c0_12 = arith.constant 0 : index
    %c0_13 = arith.constant 0 : index
    %15 = vector.load %arg6[%c0_12, %c0_13] : memref<32x32xf32, #tpu.memory_space<vmem>>, vector<32x32xf32>
    %cst_14 = arith.constant dense<0.000000e+00> : vector<32x512xf32>
    %16 = tpu.matmul %15, %14, %cst_14 {dimension_numbers = #tpu.dot_dimension_numbers<[1], [0], [0], [1], [0, 0, 1, 1], [], []>} : vector<32x32xf32>, vector<32x512xf32>, vector<32x512xf32> -> vector<32x512xf32>
    %c0_15 = arith.constant 0 : index
    %c0_16 = arith.constant 0 : index
    %17 = vector.load %arg7[%c0_15, %c0_16] : memref<32x1xf32, #tpu.memory_space<vmem>>, vector<32x1xf32>
    %18 = vector.broadcast %17 : vector<32x1xf32> to vector<32x512xf32>
    %19 = arith.addf %16, %18 : vector<32x512xf32>
    %cst_17 = arith.constant 0.000000e+00 : f32
    %20 = vector.broadcast %cst_17 : f32 to vector<32x512xf32>
    %21 = arith.maximumf %19, %20 : vector<32x512xf32>
    %c0_18 = arith.constant 0 : index
    %c0_19 = arith.constant 0 : index
    %22 = vector.load %arg8[%c0_18, %c0_19] : memref<1x32xf32, #tpu.memory_space<vmem>>, vector<1x32xf32>
    %cst_20 = arith.constant dense<0.000000e+00> : vector<1x512xf32>
    %23 = tpu.matmul %22, %21, %cst_20 {dimension_numbers = #tpu.dot_dimension_numbers<[1], [0], [0], [1], [0, 0, 1, 1], [], []>} : vector<1x32xf32>, vector<32x512xf32>, vector<1x512xf32> -> vector<1x512xf32>
    %c0_21 = arith.constant 0 : index
    %c0_22 = arith.constant 0 : index
    %24 = vector.load %arg9[%c0_21, %c0_22] : memref<1x1xf32, #tpu.memory_space<vmem>>, vector<1x1xf32>
    %25 = vector.broadcast %24 : vector<1x1xf32> to vector<1x512xf32>
    %26 = arith.addf %23, %25 : vector<1x512xf32>
    %c0_23 = arith.constant 0 : index
    %c0_24 = arith.constant 0 : index
    %27 = vector.load %arg10[%c0_23, %c0_24] : memref<1x512xf32, #tpu.memory_space<vmem>>, vector<1x512xf32>
    tpu.vector_store %arg10[%c0_23, %c0_24], %26 {strides = array<i32>} : memref<1x512xf32, #tpu.memory_space<vmem>>, vector<1x512xf32>,
    return
  }
  func.func @transform_0(%arg0: i32) -> (i32, i32) {
    %c0_i32 = arith.constant 0 : i32
    %c0_i32_0 = arith.constant 0 : i32
    return %arg0, %c0_i32 : i32, i32
  }
  func.func @transform_1(%arg0: i32) -> (i32, i32) {
    %c0_i32 = arith.constant 0 : i32
    %c0_i32_0 = arith.constant 0 : i32
    %c0_i32_1 = arith.constant 0 : i32
    return %c0_i32, %c0_i32_0 : i32, i32
  }
  func.func @transform_2(%arg0: i32) -> (i32, i32) {
    %c0_i32 = arith.constant 0 : i32
    %c0_i32_0 = arith.constant 0 : i32
    %c0_i32_1 = arith.constant 0 : i32
    return %c0_i32, %c0_i32_0 : i32, i32
  }
  func.func @transform_3(%arg0: i32) -> (i32, i32) {
    %c0_i32 = arith.constant 0 : i32
    %c0_i32_0 = arith.constant 0 : i32
    %c0_i32_1 = arith.constant 0 : i32
    return %c0_i32, %c0_i32_0 : i32, i32
  }
  func.func @transform_4(%arg0: i32) -> (i32, i32) {
    %c0_i32 = arith.constant 0 : i32
    %c0_i32_0 = arith.constant 0 : i32
    %c0_i32_1 = arith.constant 0 : i32
    return %c0_i32, %c0_i32_0 : i32, i32
  }
  func.func @transform_5(%arg0: i32) -> (i32, i32) {
    %c0_i32 = arith.constant 0 : i32
    %c0_i32_0 = arith.constant 0 : i32
    %c0_i32_1 = arith.constant 0 : i32
    return %c0_i32, %c0_i32_0 : i32, i32
  }
  func.func @transform_6(%arg0: i32) -> (i32, i32) {
    %c0_i32 = arith.constant 0 : i32
    %c0_i32_0 = arith.constant 0 : i32
    %c0_i32_1 = arith.constant 0 : i32
    return %c0_i32, %c0_i32_0 : i32, i32
  }
  func.func @transform_7(%arg0: i32) -> (i32, i32) {
    %c0_i32 = arith.constant 0 : i32
    %c0_i32_0 = arith.constant 0 : i32
    %c0_i32_1 = arith.constant 0 : i32
    return %c0_i32, %c0_i32_0 : i32, i32
  }
  func.func @transform_8(%arg0: i32) -> (i32, i32) {
    %c0_i32 = arith.constant 0 : i32
    %c0_i32_0 = arith.constant 0 : i32
    %c0_i32_1 = arith.constant 0 : i32
    return %c0_i32, %c0_i32_0 : i32, i32
  }
  func.func @transform_9(%arg0: i32) -> (i32, i32) {
    %c0_i32 = arith.constant 0 : i32
    %c0_i32_0 = arith.constant 0 : i32
    return %c0_i32, %arg0 : i32, i32
  }
}

</mosaic_0001>

<llo_original>
// kernel: tpu_custom_call.1
$region0: #{tpu_custom_call.1}
  #allocation0 [shape = 'u32[]', space=smem, size = 0x4, offset = 0x4, fixed_abs, tag = 'smem constant byte address 0x4 - core index']
  #allocation1 [shape = 'u32[144,128]{1,0:T(1,128)}', space=vmem, size = 0x12000, scoped, tag = 'internal scratch']
  #allocation2 [shape = 'f32[1,1]{1,0:T(1,128)S(1)}', space=vmem, size = 0x200, scoped, tag = 'scoped memory for tpu_custom_call.1']
  %s0 = inlined_call_operand.vmem [shape: f32[512,16], index: 0, kind: input, shape index: {}]
  %s1 = inlined_call_operand.vmem [shape: f32[32,16], index: 1, kind: input, shape index: {}]
  %s2 = inlined_call_operand.vmem [shape: f32[32,1], index: 2, kind: input, shape index: {}]
  %s3 = inlined_call_operand.vmem [shape: f32[32,32], index: 3, kind: input, shape index: {}]
  %s4 = inlined_call_operand.vmem [shape: f32[32,1], index: 4, kind: input, shape index: {}]
  %s5 = inlined_call_operand.vmem [shape: f32[32,32], index: 5, kind: input, shape index: {}]
  %s6 = inlined_call_operand.vmem [shape: f32[32,1], index: 6, kind: input, shape index: {}]
  %s7 = inlined_call_operand.vmem [shape: f32[1,32], index: 7, kind: input, shape index: {}]
  %s8 = inlined_call_operand.<no memory space> [shape: f32[1,1], index: 8, kind: input, shape index: {}]
  %s9 = inlined_call_operand.hbm [shape: f32[1,512], index: 9, kind: output, shape index: {}]
  %s10 = sld [smem:[#allocation0]]
  $region46: #{tpu_custom_call.1} parent=0
    _
  %s12 = ssub.s32 1, %s10
  %s13 = scalar_select 0, %s12, %s10
  %v14 = vstv %s8
  %15 = vst [vmem:[#allocation2] sm:$0x1] %v14
  $region1: #{tpu_custom_call.1} parent=0
    #allocation3 [shape = 'u8[2048]{0}', space=vmem, size = 0x800, scoped, tag = 'output window, operand 0, single buffered']
    #allocation4 [shape = 's32[1]{0}', space=sflag, size = 0x4, scoped, tag = 'scoped memory for tpu_custom_call.1']
    %16 = vsyncpa [#allocation4], 0
    // Predicated region
    $region2: #{tpu_custom_call.1} parent=1 // pred_check
      _
    $region3: #{tpu_custom_call.1} parent=1 // pred_check_branch
      %18 = sbr.rel (0) target = $region5
    $region4: #{tpu_custom_call.1} parent=1 // pred_region
      _
    $region5: #{tpu_custom_call.1} parent=1 // pred_fallthru
      _
    // Predicated region
    $region6: #{tpu_custom_call.1} parent=1 // pred_check
      _
    $region7: #{tpu_custom_call.1} parent=1 // pred_check_branch
      %20 = sbr.rel (0) target = $region9
    $region8: #{tpu_custom_call.1} parent=1 // pred_region
      _
    $region9: #{tpu_custom_call.1} parent=1 // pred_fallthru
      _
    // Predicated region
    $region10: #{tpu_custom_call.1} parent=1 // pred_check
      _
    $region11: #{tpu_custom_call.1} parent=1 // pred_check_branch
      %22 = sbr.rel (0) target = $region13
    $region12: #{tpu_custom_call.1} parent=1 // pred_region
      _
    $region13: #{tpu_custom_call.1} parent=1 // pred_fallthru
      _
    // Predicated region
    $region14: #{tpu_custom_call.1} parent=1 // pred_check
      _
    $region15: #{tpu_custom_call.1} parent=1 // pred_check_branch
      %24 = sbr.rel (0) target = $region17
    $region16: #{tpu_custom_call.1} parent=1 // pred_region
      _
    $region17: #{tpu_custom_call.1} parent=1 // pred_fallthru
      _
    // Predicated region
    $region18: #{tpu_custom_call.1} parent=1 // pred_check
      _
    $region19: #{tpu_custom_call.1} parent=1 // pred_check_branch
      %26 = sbr.rel (0) target = $region21
    $region20: #{tpu_custom_call.1} parent=1 // pred_region
      _
    $region21: #{tpu_custom_call.1} parent=1 // pred_fallthru
      _
    // Predicated region
    $region22: #{tpu_custom_call.1} parent=1 // pred_check
      _
    $region23: #{tpu_custom_call.1} parent=1 // pred_check_branch
      %28 = sbr.rel (0) target = $region25
    $region24: #{tpu_custom_call.1} parent=1 // pred_region
      _
    $region25: #{tpu_custom_call.1} parent=1 // pred_fallthru
      _
    // Predicated region
    $region26: #{tpu_custom_call.1} parent=1 // pred_check
      _
    $region27: #{tpu_custom_call.1} parent=1 // pred_check_branch
      %30 = sbr.rel (0) target = $region29
    $region28: #{tpu_custom_call.1} parent=1 // pred_region
      _
    $region29: #{tpu_custom_call.1} parent=1 // pred_fallthru
      _
    // Predicated region
    $region30: #{tpu_custom_call.1} parent=1 // pred_check
      _
    $region31: #{tpu_custom_call.1} parent=1 // pred_check_branch
      %32 = sbr.rel (0) target = $region33
    $region32: #{tpu_custom_call.1} parent=1 // pred_region
      _
    $region33: #{tpu_custom_call.1} parent=1 // pred_fallthru
      _
    // Predicated region
    $region34: #{tpu_custom_call.1} parent=1 // pred_check
      _
    $region35: #{tpu_custom_call.1} parent=1 // pred_check_branch
      %34 = sbr.rel (0) target = $region37
    $region36: #{tpu_custom_call.1} parent=1 // pred_region
      _
    $region37: #{tpu_custom_call.1} parent=1 // pred_fallthru
      _
    %v35 = vld [vmem:[%s0] sm:$0xff]
    %v36 = vld [vmem:[%s0 + $0x8] sm:$0xff]
    %v37 = vld [vmem:[%s0 + $0x10] sm:$0xff]
    %v38 = vld [vmem:[%s0 + $0x18] sm:$0xff]
    %v39 = vld [vmem:[%s0 + $0x20] sm:$0xff]
    %v40 = vld [vmem:[%s0 + $0x28] sm:$0xff]
    %v41 = vld [vmem:[%s0 + $0x30] sm:$0xff]
    %v42 = vld [vmem:[%s0 + $0x38] sm:$0xff]
    %v43 = vld [vmem:[%s0 + $0x40] sm:$0xff]
    %v44 = vld [vmem:[%s0 + $0x48] sm:$0xff]
    %v45 = vld [vmem:[%s0 + $0x50] sm:$0xff]
    %v46 = vld [vmem:[%s0 + $0x58] sm:$0xff]
    %v47 = vld [vmem:[%s0 + $0x60] sm:$0xff]
    %v48 = vld [vmem:[%s0 + $0x68] sm:$0xff]
    %v49 = vld [vmem:[%s0 + $0x70] sm:$0xff]
    %v50 = vld [vmem:[%s0 + $0x78] sm:$0xff]
    %v51 = vld [vmem:[%s0 + $0x80] sm:$0xff]
    %v52 = vld [vmem:[%s0 + $0x88] sm:$0xff]
    %v53 = vld [vmem:[%s0 + $0x90] sm:$0xff]
    %v54 = vld [vmem:[%s0 + $0x98] sm:$0xff]
    %v55 = vld [vmem:[%s0 + $0xa0] sm:$0xff]
    %v56 = vld [vmem:[%s0 + $0xa8] sm:$0xff]
    %v57 = vld [vmem:[%s0 + $0xb0] sm:$0xff]
    %v58 = vld [vmem:[%s0 + $0xb8] sm:$0xff]
    %v59 = vld [vmem:[%s0 + $0xc0] sm:$0xff]
    %v60 = vld [vmem:[%s0 + $0xc8] sm:$0xff]
    %v61 = vld [vmem:[%s0 + $0xd0] sm:$0xff]
    %v62 = vld [vmem:[%s0 + $0xd8] sm:$0xff]
    %v63 = vld [vmem:[%s0 + $0xe0] sm:$0xff]
    %v64 = vld [vmem:[%s0 + $0xe8] sm:$0xff]
    %v65 = vld [vmem:[%s0 + $0xf0] sm:$0xff]
    %v66 = vld [vmem:[%s0 + $0xf8] sm:$0xff]
    %v67 = vld [vmem:[%s0 + $0x100] sm:$0xff]
    %v68 = vld [vmem:[%s0 + $0x108] sm:$0xff]
    %v69 = vld [vmem:[%s0 + $0x110] sm:$0xff]
    %v70 = vld [vmem:[%s0 + $0x118] sm:$0xff]
    %v71 = vld [vmem:[%s0 + $0x120] sm:$0xff]
    %v72 = vld [vmem:[%s0 + $0x128] sm:$0xff]
    %v73 = vld [vmem:[%s0 + $0x130] sm:$0xff]
    %v74 = vld [vmem:[%s0 + $0x138] sm:$0xff]
    %v75 = vld [vmem:[%s0 + $0x140] sm:$0xff]
    %v76 = vld [vmem:[%s0 + $0x148] sm:$0xff]
    %v77 = vld [vmem:[%s0 + $0x150] sm:$0xff]
    %v78 = vld [vmem:[%s0 + $0x158] sm:$0xff]
    %v79 = vld [vmem:[%s0 + $0x160] sm:$0xff]
    %v80 = vld [vmem:[%s0 + $0x168] sm:$0xff]
    %v81 = vld [vmem:[%s0 + $0x170] sm:$0xff]
    %v82 = vld [vmem:[%s0 + $0x178] sm:$0xff]
    %v83 = vld [vmem:[%s0 + $0x180] sm:$0xff]
    %v84 = vld [vmem:[%s0 + $0x188] sm:$0xff]
    %v85 = vld [vmem:[%s0 + $0x190] sm:$0xff]
    %v86 = vld [vmem:[%s0 + $0x198] sm:$0xff]
    %v87 = vld [vmem:[%s0 + $0x1a0] sm:$0xff]
    %v88 = vld [vmem:[%s0 + $0x1a8] sm:$0xff]
    %v89 = vld [vmem:[%s0 + $0x1b0] sm:$0xff]
    %v90 = vld [vmem:[%s0 + $0x1b8] sm:$0xff]
    %v91 = vld [vmem:[%s0 + $0x1c0] sm:$0xff]
    %v92 = vld [vmem:[%s0 + $0x1c8] sm:$0xff]
    %v93 = vld [vmem:[%s0 + $0x1d0] sm:$0xff]
    %v94 = vld [vmem:[%s0 + $0x1d8] sm:$0xff]
    %v95 = vld [vmem:[%s0 + $0x1e0] sm:$0xff]
    %v96 = vld [vmem:[%s0 + $0x1e8] sm:$0xff]
    %v97 = vld [vmem:[%s0 + $0x1f0] sm:$0xff]
    %v98 = vld [vmem:[%s0 + $0x1f8] sm:$0xff]
    %v99 = vld [vmem:[%s1] sm:$0xff]
    %v100 = vld [vmem:[%s1 + $0x8] sm:$0xff]
    %v101 = vld [vmem:[%s1 + $0x10] sm:$0xff]
    %v102 = vld [vmem:[%s1 + $0x18] sm:$0xff]
    %v103 = vld [vmem:[%s2] sm:$0xff]
    %v104 = vld [vmem:[%s2 + $0x8] sm:$0xff]
    %v105 = vld [vmem:[%s2 + $0x10] sm:$0xff]
    %v106 = vld [vmem:[%s2 + $0x18] sm:$0xff]
    %108 = vset.pattern.permute.xlu0 0
    %109 = vperm.xlu0 %108, %v103
    %v110 = vpop.permute.xlu0 %109
    %113 = vset.pattern.permute.xlu0 0
    %114 = vperm.xlu0 %113, %v104
    %v115 = vpop.permute.xlu0 %114
    %118 = vset.pattern.permute.xlu0 0
    %119 = vperm.xlu0 %118, %v105
    %v120 = vpop.permute.xlu0 %119
    %123 = vset.pattern.permute.xlu0 0
    %124 = vperm.xlu0 %123, %v106
    %v125 = vpop.permute.xlu0 %124
    %vm127 = vcmask 130048
    %v129 = vsel %vm127, %v99, 0
    %v132 = vsel %vm127, %v100, 0
    %v135 = vsel %vm127, %v101, 0
    %v138 = vsel %vm127, %v102, 0
    %v141 = vsel %vm127, %v35, 0
    %v144 = vsel %vm127, %v36, 0
    %v147 = vsel %vm127, %v37, 0
    %v150 = vsel %vm127, %v38, 0
    %v153 = vsel %vm127, %v39, 0
    %v156 = vsel %vm127, %v40, 0
    %v159 = vsel %vm127, %v41, 0
    %v162 = vsel %vm127, %v42, 0
    %v165 = vsel %vm127, %v43, 0
    %v168 = vsel %vm127, %v44, 0
    %v171 = vsel %vm127, %v45, 0
    %v174 = vsel %vm127, %v46, 0
    %v177 = vsel %vm127, %v47, 0
    %v180 = vsel %vm127, %v48, 0
    %v183 = vsel %vm127, %v49, 0
    %v186 = vsel %vm127, %v50, 0
    %v189 = vsel %vm127, %v51, 0
    %v192 = vsel %vm127, %v52, 0
    %v195 = vsel %vm127, %v53, 0
    %v198 = vsel %vm127, %v54, 0
    %v201 = vsel %vm127, %v55, 0
    %v204 = vsel %vm127, %v56, 0
    %v207 = vsel %vm127, %v57, 0
    %v210 = vsel %vm127, %v58, 0
    %v213 = vsel %vm127, %v59, 0
    %v216 = vsel %vm127, %v60, 0
    %v219 = vsel %vm127, %v61, 0
    %v222 = vsel %vm127, %v62, 0
    %v225 = vsel %vm127, %v63, 0
    %v228 = vsel %vm127, %v64, 0
    %v231 = vsel %vm127, %v65, 0
    %v234 = vsel %vm127, %v66, 0
    %v237 = vsel %vm127, %v67, 0
    %v240 = vsel %vm127, %v68, 0
    %v243 = vsel %vm127, %v69, 0
    %v246 = vsel %vm127, %v70, 0
    %v249 = vsel %vm127, %v71, 0
    %v252 = vsel %vm127, %v72, 0
    %v255 = vsel %vm127, %v73, 0
    %v258 = vsel %vm127, %v74, 0
    %v261 = vsel %vm127, %v75, 0
    %v264 = vsel %vm127, %v76, 0
    %v267 = vsel %vm127, %v77, 0
    %v270 = vsel %vm127, %v78, 0
    %v273 = vsel %vm127, %v79, 0
    %v276 = vsel %vm127, %v80, 0
    %v279 = vsel %vm127, %v81, 0
    %v282 = vsel %vm127, %v82, 0
    %v285 = vsel %vm127, %v83, 0
    %v288 = vsel %vm127, %v84, 0
    %v291 = vsel %vm127, %v85, 0
    %v294 = vsel %vm127, %v86, 0
    %v297 = vsel %vm127, %v87, 0
    %v300 = vsel %vm127, %v88, 0
    %v303 = vsel %vm127, %v89, 0
    %v306 = vsel %vm127, %v90, 0
    %v309 = vsel %vm127, %v91, 0
    %v312 = vsel %vm127, %v92, 0
    %v315 = vsel %vm127, %v93, 0
    %v318 = vsel %vm127, %v94, 0
    %v321 = vsel %vm127, %v95, 0
    %v324 = vsel %vm127, %v96, 0
    %v327 = vsel %vm127, %v97, 0
    %v330 = vsel %vm127, %v98, 0
    %332 = vmatprep.subr.mxu0 0.0
    %333 = vmatpush1.xpose.msra.mxu0 %v186
    %334 = vmatprep.subr.mxu0 0.0
    %335 = vmatpush1.xpose.msra.mxu0 %v183
    %336 = vmatprep.subr.mxu0 0.0
    %337 = vmatpush1.xpose.msra.mxu0 %v180
    %338 = vmatprep.subr.mxu0 0.0
    %339 = vmatpush1.xpose.msra.mxu0 %v177
    %340 = vmatprep.subr.mxu0 0.0
    %341 = vmatpush1.xpose.msra.mxu0 %v174
    %342 = vmatprep.subr.mxu0 0.0
    %343 = vmatpush1.xpose.msra.mxu0 %v171
    %344 = vmatprep.subr.mxu0 0.0
    %345 = vmatpush1.xpose.msra.mxu0 %v168
    %346 = vmatprep.subr.mxu0 0.0
    %347 = vmatpush1.xpose.msra.mxu0 %v165
    %348 = vmatprep.subr.mxu0 0.0
    %349 = vmatpush1.xpose.msra.mxu0 %v162
    %350 = vmatprep.subr.mxu0 0.0
    %351 = vmatpush1.xpose.msra.mxu0 %v159
    %352 = vmatprep.subr.mxu0 0.0
    %353 = vmatpush1.xpose.msra.mxu0 %v156
    %354 = vmatprep.subr.mxu0 0.0
    %355 = vmatpush1.xpose.msra.mxu0 %v153
    %356 = vmatprep.subr.mxu0 0.0
    %357 = vmatpush1.xpose.msra.mxu0 %v150
    %358 = vmatprep.subr.mxu0 0.0
    %359 = vmatpush1.xpose.msra.mxu0 %v147
    %360 = vmatprep.subr.mxu0 0.0
    %361 = vmatpush1.xpose.msra.mxu0 %v144
    %362 = vmatprep.subr.mxu0 0.0
    %363 = vmatpush1.xpose.msra.mxu0 %v141
    %364 = vmatprep.subr.mxu0 0.0
    %365 = vmatpush2.xpose.msra.mxu0 %v234
    %366 = vmatprep.subr.mxu0 0.0
    %367 = vmatpush2.xpose.msra.mxu0 %v231
    %368 = vmatprep.subr.mxu0 0.0
    %369 = vmatpush2.xpose.msra.mxu0 %v228
    %370 = vmatprep.subr.mxu0 0.0
    %371 = vmatpush2.xpose.msra.mxu0 %v225
    %372 = vmatprep.subr.mxu0 0.0
    %373 = vmatpush2.xpose.msra.mxu0 %v222
    %374 = vmatprep.subr.mxu0 0.0
    %375 = vmatpush2.xpose.msra.mxu0 %v219
    %376 = vmatprep.subr.mxu0 0.0
    %377 = vmatpush2.xpose.msra.mxu0 %v216
    %378 = vmatprep.subr.mxu0 0.0
    %379 = vmatpush2.xpose.msra.mxu0 %v213
    %380 = vmatprep.subr.mxu0 0.0
    %381 = vmatpush2.xpose.msra.mxu0 %v210
    %382 = vmatprep.subr.mxu0 0.0
    %383 = vmatpush2.xpose.msra.mxu0 %v207
    %384 = vmatprep.subr.mxu0 0.0
    %385 = vmatpush2.xpose.msra.mxu0 %v204
    %386 = vmatprep.subr.mxu0 0.0
    %387 = vmatpush2.xpose.msra.mxu0 %v201
    %388 = vmatprep.subr.mxu0 0.0
    %389 = vmatpush2.xpose.msra.mxu0 %v198
    %390 = vmatprep.subr.mxu0 0.0
    %391 = vmatpush2.xpose.msra.mxu0 %v195
    %392 = vmatprep.subr.mxu0 0.0
    %393 = vmatpush2.xpose.msra.mxu0 %v192
    %394 = vmatprep.subr.mxu0 0.0
    %395 = vmatpush2.xpose.msra.mxu0 %v189
    %396 = vmatprep.mubr.f32.mxu0 0.0
    %397 = vmatmul.mubr.f32.gmra.mxu0 %v129
    %v398 = vpop.f32.mrf.mxu0
    %v399 = vadd.f32 %v110, %v398
    %v400 = vpop.f32.mrf.mxu0
    %v401 = vadd.f32 %v110, %v400
    %402 = vmatprep.mubr.f32.mxu0 0.0
    %403 = vmatmul.mubr.f32.gmra.mxu0 %v132
    %v404 = vpop.f32.mrf.mxu0
    %v405 = vadd.f32 %v115, %v404
    %v406 = vpop.f32.mrf.mxu0
    %v407 = vadd.f32 %v115, %v406
    %408 = vmatprep.mubr.f32.mxu0 0.0
    %409 = vmatmul.mubr.f32.gmra.mxu0 %v135
    %v410 = vpop.f32.mrf.mxu0
    %v411 = vadd.f32 %v120, %v410
    %v412 = vpop.f32.mrf.mxu0
    %v413 = vadd.f32 %v120, %v412
    %414 = vmatprep.mubr.f32.mxu0 0.0
    %415 = vmatmul.mubr.f32.gmra.mxu0 %v138
    %v416 = vpop.f32.mrf.mxu0
    %v417 = vadd.f32 %v125, %v416
    %v418 = vpop.f32.mrf.mxu0
    %v419 = vadd.f32 %v125, %v418
    %420 = vdwg.mxu0
    %421 = vmatprep.subr.mxu0 0.0
    %422 = vmatpush1.xpose.msra.mxu0 %v282
    %423 = vmatprep.subr.mxu0 0.0
    %424 = vmatpush1.xpose.msra.mxu0 %v279
    %425 = vmatprep.subr.mxu0 0.0
    %426 = vmatpush1.xpose.msra.mxu0 %v276
    %427 = vmatprep.subr.mxu0 0.0
    %428 = vmatpush1.xpose.msra.mxu0 %v273
    %429 = vmatprep.subr.mxu0 0.0
    %430 = vmatpush1.xpose.msra.mxu0 %v270
    %431 = vmatprep.subr.mxu0 0.0
    %432 = vmatpush1.xpose.msra.mxu0 %v267
    %433 = vmatprep.subr.mxu0 0.0
    %434 = vmatpush1.xpose.msra.mxu0 %v264
    %435 = vmatprep.subr.mxu0 0.0
    %436 = vmatpush1.xpose.msra.mxu0 %v261
    %437 = vmatprep.subr.mxu0 0.0
    %438 = vmatpush1.xpose.msra.mxu0 %v258
    %439 = vmatprep.subr.mxu0 0.0
    %440 = vmatpush1.xpose.msra.mxu0 %v255
    %441 = vmatprep.subr.mxu0 0.0
    %442 = vmatpush1.xpose.msra.mxu0 %v252
    %443 = vmatprep.subr.mxu0 0.0
    %444 = vmatpush1.xpose.msra.mxu0 %v249
    %445 = vmatprep.subr.mxu0 0.0
    %446 = vmatpush1.xpose.msra.mxu0 %v246
    %447 = vmatprep.subr.mxu0 0.0
    %448 = vmatpush1.xpose.msra.mxu0 %v243
    %449 = vmatprep.subr.mxu0 0.0
    %450 = vmatpush1.xpose.msra.mxu0 %v240
    %451 = vmatprep.subr.mxu0 0.0
    %452 = vmatpush1.xpose.msra.mxu0 %v237
    %453 = vmatprep.subr.mxu0 0.0
    %454 = vmatpush2.xpose.msra.mxu0 %v330
    %455 = vmatprep.subr.mxu0 0.0
    %456 = vmatpush2.xpose.msra.mxu0 %v327
    %457 = vmatprep.subr.mxu0 0.0
    %458 = vmatpush2.xpose.msra.mxu0 %v324
    %459 = vmatprep.subr.mxu0 0.0
    %460 = vmatpush2.xpose.msra.mxu0 %v321
    %461 = vmatprep.subr.mxu0 0.0
    %462 = vmatpush2.xpose.msra.mxu0 %v318
    %463 = vmatprep.subr.mxu0 0.0
    %464 = vmatpush2.xpose.msra.mxu0 %v315
    %465 = vmatprep.subr.mxu0 0.0
    %466 = vmatpush2.xpose.msra.mxu0 %v312
    %467 = vmatprep.subr.mxu0 0.0
    %468 = vmatpush2.xpose.msra.mxu0 %v309
    %469 = vmatprep.subr.mxu0 0.0
    %470 = vmatpush2.xpose.msra.mxu0 %v306
    %471 = vmatprep.subr.mxu0 0.0
    %472 = vmatpush2.xpose.msra.mxu0 %v303
    %473 = vmatprep.subr.mxu0 0.0
    %474 = vmatpush2.xpose.msra.mxu0 %v300
    %475 = vmatprep.subr.mxu0 0.0
    %476 = vmatpush2.xpose.msra.mxu0 %v297
    %477 = vmatprep.subr.mxu0 0.0
    %478 = vmatpush2.xpose.msra.mxu0 %v294
    %479 = vmatprep.subr.mxu0 0.0
    %480 = vmatpush2.xpose.msra.mxu0 %v291
    %481 = vmatprep.subr.mxu0 0.0
    %482 = vmatpush2.xpose.msra.mxu0 %v288
    %483 = vmatprep.subr.mxu0 0.0
    %484 = vmatpush2.xpose.msra.mxu0 %v285
    %485 = vmatprep.mubr.f32.mxu0 0.0
    %486 = vmatmul.mubr.f32.gmra.mxu0 %v129
    %v487 = vpop.f32.mrf.mxu0
    %v488 = vadd.f32 %v110, %v487
    %v489 = vpop.f32.mrf.mxu0
    %v490 = vadd.f32 %v110, %v489
    %491 = vmatprep.mubr.f32.mxu0 0.0
    %492 = vmatmul.mubr.f32.gmra.mxu0 %v132
    %v493 = vpop.f32.mrf.mxu0
    %v494 = vadd.f32 %v115, %v493
    %v495 = vpop.f32.mrf.mxu0
    %v496 = vadd.f32 %v115, %v495
    %497 = vmatprep.mubr.f32.mxu0 0.0
    %498 = vmatmul.mubr.f32.gmra.mxu0 %v135
    %v499 = vpop.f32.mrf.mxu0
    %v500 = vadd.f32 %v120, %v499
    %v501 = vpop.f32.mrf.mxu0
    %v502 = vadd.f32 %v120, %v501
    %503 = vmatprep.mubr.f32.mxu0 0.0
    %504 = vmatmul.mubr.f32.gmra.mxu0 %v138
    %v505 = vpop.f32.mrf.mxu0
    %v506 = vadd.f32 %v125, %v505
    %v507 = vpop.f32.mrf.mxu0
    %v508 = vadd.f32 %v125, %v507
    %509 = vdwg.mxu0
    %v510 = vmax.f32 %v399, 0.0
    %v511 = vmax.f32 %v401, 0.0
    %v512 = vmax.f32 %v488, 0.0
    %v513 = vmax.f32 %v490, 0.0
    %v514 = vmax.f32 %v405, 0.0
    %v515 = vmax.f32 %v407, 0.0
    %v516 = vmax.f32 %v494, 0.0
    %v517 = vmax.f32 %v496, 0.0
    %v518 = vmax.f32 %v411, 0.0
    %v519 = vmax.f32 %v413, 0.0
    %v520 = vmax.f32 %v500, 0.0
    %v521 = vmax.f32 %v502, 0.0
    %v522 = vmax.f32 %v417, 0.0
    %v523 = vmax.f32 %v419, 0.0
    %v524 = vmax.f32 %v506, 0.0
    %v525 = vmax.f32 %v508, 0.0
    %v526 = vld [vmem:[%s3] sm:$0xff]
    %v527 = vld [vmem:[%s3 + $0x8] sm:$0xff]
    %v528 = vld [vmem:[%s3 + $0x10] sm:$0xff]
    %v529 = vld [vmem:[%s3 + $0x18] sm:$0xff]
    %v530 = vld [vmem:[%s4] sm:$0xff]
    %v531 = vld [vmem:[%s4 + $0x8] sm:$0xff]
    %v532 = vld [vmem:[%s4 + $0x10] sm:$0xff]
    %v533 = vld [vmem:[%s4 + $0x18] sm:$0xff]
    %535 = vset.pattern.permute.xlu0 0
    %536 = vperm.xlu0 %535, %v530
    %v537 = vpop.permute.xlu0 %536
    %540 = vset.pattern.permute.xlu0 0
    %541 = vperm.xlu0 %540, %v531
    %v542 = vpop.permute.xlu0 %541
    %545 = vset.pattern.permute.xlu0 0
    %546 = vperm.xlu0 %545, %v532
    %v547 = vpop.permute.xlu0 %546
    %550 = vset.pattern.permute.xlu0 0
    %551 = vperm.xlu0 %550, %v533
    %v552 = vpop.permute.xlu0 %551
    %vm554 = vcmask 261120
    %v556 = vsel %vm554, %v526, 0
    %v559 = vsel %vm554, %v527, 0
    %v562 = vsel %vm554, %v528, 0
    %v565 = vsel %vm554, %v529, 0
    %567 = vmatprep.subr.mxu0 0.0
    %568 = vmatpush1.msra.mxu0 0.0
    %569 = vmatprep.subr.mxu0 0.0
    %570 = vmatpush1.msra.mxu0 0.0
    %571 = vmatprep.subr.mxu0 0.0
    %572 = vmatpush1.msra.mxu0 0.0
    %573 = vmatprep.subr.mxu0 0.0
    %574 = vmatpush1.msra.mxu0 0.0
    %575 = vmatprep.subr.mxu0 0.0
    %576 = vmatpush1.msra.mxu0 0.0
    %577 = vmatprep.subr.mxu0 0.0
    %578 = vmatpush1.msra.mxu0 0.0
    %579 = vmatprep.subr.mxu0 0.0
    %580 = vmatpush1.msra.mxu0 0.0
    %581 = vmatprep.subr.mxu0 0.0
    %582 = vmatpush1.msra.mxu0 0.0
    %583 = vmatprep.subr.mxu0 0.0
    %584 = vmatpush1.msra.mxu0 0.0
    %585 = vmatprep.subr.mxu0 0.0
    %586 = vmatpush1.msra.mxu0 0.0
    %587 = vmatprep.subr.mxu0 0.0
    %588 = vmatpush1.msra.mxu0 0.0
    %589 = vmatprep.subr.mxu0 0.0
    %590 = vmatpush1.msra.mxu0 0.0
    %591 = vmatprep.subr.mxu0 %v523
    %592 = vmatpush1.msra.mxu0 %v522
    %593 = vmatprep.subr.mxu0 %v519
    %594 = vmatpush1.msra.mxu0 %v518
    %595 = vmatprep.subr.mxu0 %v515
    %596 = vmatpush1.msra.mxu0 %v514
    %597 = vmatprep.subr.mxu0 %v511
    %598 = vmatpush1.msra.mxu0 %v510
    %599 = vmatprep.subr.mxu0 0.0
    %600 = vmatpush2.msra.mxu0 0.0
    %601 = vmatprep.subr.mxu0 0.0
    %602 = vmatpush2.msra.mxu0 0.0
    %603 = vmatprep.subr.mxu0 0.0
    %604 = vmatpush2.msra.mxu0 0.0
    %605 = vmatprep.subr.mxu0 0.0
    %606 = vmatpush2.msra.mxu0 0.0
    %607 = vmatprep.subr.mxu0 0.0
    %608 = vmatpush2.msra.mxu0 0.0
    %609 = vmatprep.subr.mxu0 0.0
    %610 = vmatpush2.msra.mxu0 0.0
    %611 = vmatprep.subr.mxu0 0.0
    %612 = vmatpush2.msra.mxu0 0.0
    %613 = vmatprep.subr.mxu0 0.0
    %614 = vmatpush2.msra.mxu0 0.0
    %615 = vmatprep.subr.mxu0 0.0
    %616 = vmatpush2.msra.mxu0 0.0
    %617 = vmatprep.subr.mxu0 0.0
    %618 = vmatpush2.msra.mxu0 0.0
    %619 = vmatprep.subr.mxu0 0.0
    %620 = vmatpush2.msra.mxu0 0.0
    %621 = vmatprep.subr.mxu0 0.0
    %622 = vmatpush2.msra.mxu0 0.0
    %623 = vmatprep.subr.mxu0 0.0
    %624 = vmatpush2.msra.mxu0 0.0
    %625 = vmatprep.subr.mxu0 0.0
    %626 = vmatpush2.msra.mxu0 0.0
    %627 = vmatprep.subr.mxu0 0.0
    %628 = vmatpush2.msra.mxu0 0.0
    %629 = vmatprep.subr.mxu0 0.0
    %630 = vmatpush2.msra.mxu0 0.0
    %631 = vmatprep.mubr.f32.mxu0 0.0
    %632 = vmatmul.mubr.f32.gmra.mxu0 %v556
    %v633 = vpop.f32.mrf.mxu0
    %v634 = vadd.f32 %v537, %v633
    %v635 = vpop.f32.mrf.mxu0
    %v636 = vadd.f32 %v537, %v635
    %637 = vmatprep.mubr.f32.mxu0 0.0
    %638 = vmatmul.mubr.f32.gmra.mxu0 %v559
    %v639 = vpop.f32.mrf.mxu0
    %v640 = vadd.f32 %v542, %v639
    %v641 = vpop.f32.mrf.mxu0
    %v642 = vadd.f32 %v542, %v641
    %643 = vmatprep.mubr.f32.mxu0 0.0
    %644 = vmatmul.mubr.f32.gmra.mxu0 %v562
    %v645 = vpop.f32.mrf.mxu0
    %v646 = vadd.f32 %v547, %v645
    %v647 = vpop.f32.mrf.mxu0
    %v648 = vadd.f32 %v547, %v647
    %649 = vmatprep.mubr.f32.mxu0 0.0
    %650 = vmatmul.mubr.f32.gmra.mxu0 %v565
    %v651 = vpop.f32.mrf.mxu0
    %v652 = vadd.f32 %v552, %v651
    %v653 = vpop.f32.mrf.mxu0
    %v654 = vadd.f32 %v552, %v653
    %655 = vdwg.mxu0
    %656 = vmatprep.subr.mxu0 0.0
    %657 = vmatpush1.msra.mxu0 0.0
    %658 = vmatprep.subr.mxu0 0.0
    %659 = vmatpush1.msra.mxu0 0.0
    %660 = vmatprep.subr.mxu0 0.0
    %661 = vmatpush1.msra.mxu0 0.0
    %662 = vmatprep.subr.mxu0 0.0
    %663 = vmatpush1.msra.mxu0 0.0
    %664 = vmatprep.subr.mxu0 0.0
    %665 = vmatpush1.msra.mxu0 0.0
    %666 = vmatprep.subr.mxu0 0.0
    %667 = vmatpush1.msra.mxu0 0.0
    %668 = vmatprep.subr.mxu0 0.0
    %669 = vmatpush1.msra.mxu0 0.0
    %670 = vmatprep.subr.mxu0 0.0
    %671 = vmatpush1.msra.mxu0 0.0
    %672 = vmatprep.subr.mxu0 0.0
    %673 = vmatpush1.msra.mxu0 0.0
    %674 = vmatprep.subr.mxu0 0.0
    %675 = vmatpush1.msra.mxu0 0.0
    %676 = vmatprep.subr.mxu0 0.0
    %677 = vmatpush1.msra.mxu0 0.0
    %678 = vmatprep.subr.mxu0 0.0
    %679 = vmatpush1.msra.mxu0 0.0
    %680 = vmatprep.subr.mxu0 %v525
    %681 = vmatpush1.msra.mxu0 %v524
    %682 = vmatprep.subr.mxu0 %v521
    %683 = vmatpush1.msra.mxu0 %v520
    %684 = vmatprep.subr.mxu0 %v517
    %685 = vmatpush1.msra.mxu0 %v516
    %686 = vmatprep.subr.mxu0 %v513
    %687 = vmatpush1.msra.mxu0 %v512
    %688 = vmatprep.subr.mxu0 0.0
    %689 = vmatpush2.msra.mxu0 0.0
    %690 = vmatprep.subr.mxu0 0.0
    %691 = vmatpush2.msra.mxu0 0.0
    %692 = vmatprep.subr.mxu0 0.0
    %693 = vmatpush2.msra.mxu0 0.0
    %694 = vmatprep.subr.mxu0 0.0
    %695 = vmatpush2.msra.mxu0 0.0
    %696 = vmatprep.subr.mxu0 0.0
    %697 = vmatpush2.msra.mxu0 0.0
    %698 = vmatprep.subr.mxu0 0.0
    %699 = vmatpush2.msra.mxu0 0.0
    %700 = vmatprep.subr.mxu0 0.0
    %701 = vmatpush2.msra.mxu0 0.0
    %702 = vmatprep.subr.mxu0 0.0
    %703 = vmatpush2.msra.mxu0 0.0
    %704 = vmatprep.subr.mxu0 0.0
    %705 = vmatpush2.msra.mxu0 0.0
    %706 = vmatprep.subr.mxu0 0.0
    %707 = vmatpush2.msra.mxu0 0.0
    %708 = vmatprep.subr.mxu0 0.0
    %709 = vmatpush2.msra.mxu0 0.0
    %710 = vmatprep.subr.mxu0 0.0
    %711 = vmatpush2.msra.mxu0 0.0
    %712 = vmatprep.subr.mxu0 0.0
    %713 = vmatpush2.msra.mxu0 0.0
    %714 = vmatprep.subr.mxu0 0.0
    %715 = vmatpush2.msra.mxu0 0.0
    %716 = vmatprep.subr.mxu0 0.0
    %717 = vmatpush2.msra.mxu0 0.0
    %718 = vmatprep.subr.mxu0 0.0
    %719 = vmatpush2.msra.mxu0 0.0
    %720 = vmatprep.mubr.f32.mxu0 0.0
    %721 = vmatmul.mubr.f32.gmra.mxu0 %v556
    %v722 = vpop.f32.mrf.mxu0
    %v723 = vadd.f32 %v537, %v722
    %v724 = vpop.f32.mrf.mxu0
    %v725 = vadd.f32 %v537, %v724
    %726 = vmatprep.mubr.f32.mxu0 0.0
    %727 = vmatmul.mubr.f32.gmra.mxu0 %v559
    %v728 = vpop.f32.mrf.mxu0
    %v729 = vadd.f32 %v542, %v728
    %v730 = vpop.f32.mrf.mxu0
    %v731 = vadd.f32 %v542, %v730
    %732 = vmatprep.mubr.f32.mxu0 0.0
    %733 = vmatmul.mubr.f32.gmra.mxu0 %v562
    %v734 = vpop.f32.mrf.mxu0
    %v735 = vadd.f32 %v547, %v734
    %v736 = vpop.f32.mrf.mxu0
    %v737 = vadd.f32 %v547, %v736
    %738 = vmatprep.mubr.f32.mxu0 0.0
    %739 = vmatmul.mubr.f32.gmra.mxu0 %v565
    %v740 = vpop.f32.mrf.mxu0
    %v741 = vadd.f32 %v552, %v740
    %v742 = vpop.f32.mrf.mxu0
    %v743 = vadd.f32 %v552, %v742
    %744 = vdwg.mxu0
    %v745 = vmax.f32 %v634, 0.0
    %v746 = vmax.f32 %v636, 0.0
    %v747 = vmax.f32 %v723, 0.0
    %v748 = vmax.f32 %v725, 0.0
    %v749 = vmax.f32 %v640, 0.0
    %v750 = vmax.f32 %v642, 0.0
    %v751 = vmax.f32 %v729, 0.0
    %v752 = vmax.f32 %v731, 0.0
    %v753 = vmax.f32 %v646, 0.0
    %v754 = vmax.f32 %v648, 0.0
    %v755 = vmax.f32 %v735, 0.0
    %v756 = vmax.f32 %v737, 0.0
    %v757 = vmax.f32 %v652, 0.0
    %v758 = vmax.f32 %v654, 0.0
    %v759 = vmax.f32 %v741, 0.0
    %v760 = vmax.f32 %v743, 0.0
    %v761 = vld [vmem:[%s5] sm:$0xff]
    %v762 = vld [vmem:[%s5 + $0x8] sm:$0xff]
    %v763 = vld [vmem:[%s5 + $0x10] sm:$0xff]
    %v764 = vld [vmem:[%s5 + $0x18] sm:$0xff]
    %v765 = vld [vmem:[%s6] sm:$0xff]
    %v766 = vld [vmem:[%s6 + $0x8] sm:$0xff]
    %v767 = vld [vmem:[%s6 + $0x10] sm:$0xff]
    %v768 = vld [vmem:[%s6 + $0x18] sm:$0xff]
    %770 = vset.pattern.permute.xlu0 0
    %771 = vperm.xlu0 %770, %v765
    %v772 = vpop.permute.xlu0 %771
    %775 = vset.pattern.permute.xlu0 0
    %776 = vperm.xlu0 %775, %v766
    %v777 = vpop.permute.xlu0 %776
    %780 = vset.pattern.permute.xlu0 0
    %781 = vperm.xlu0 %780, %v767
    %v782 = vpop.permute.xlu0 %781
    %785 = vset.pattern.permute.xlu0 0
    %786 = vperm.xlu0 %785, %v768
    %v787 = vpop.permute.xlu0 %786
    %v790 = vsel %vm554, %v761, 0
    %v793 = vsel %vm554, %v762, 0
    %v796 = vsel %vm554, %v763, 0
    %v799 = vsel %vm554, %v764, 0
    %801 = vmatprep.subr.mxu0 0.0
    %802 = vmatpush1.msra.mxu0 0.0
    %803 = vmatprep.subr.mxu0 0.0
    %804 = vmatpush1.msra.mxu0 0.0
    %805 = vmatprep.subr.mxu0 0.0
    %806 = vmatpush1.msra.mxu0 0.0
    %807 = vmatprep.subr.mxu0 0.0
    %808 = vmatpush1.msra.mxu0 0.0
    %809 = vmatprep.subr.mxu0 0.0
    %810 = vmatpush1.msra.mxu0 0.0
    %811 = vmatprep.subr.mxu0 0.0
    %812 = vmatpush1.msra.mxu0 0.0
    %813 = vmatprep.subr.mxu0 0.0
    %814 = vmatpush1.msra.mxu0 0.0
    %815 = vmatprep.subr.mxu0 0.0
    %816 = vmatpush1.msra.mxu0 0.0
    %817 = vmatprep.subr.mxu0 0.0
    %818 = vmatpush1.msra.mxu0 0.0
    %819 = vmatprep.subr.mxu0 0.0
    %820 = vmatpush1.msra.mxu0 0.0
    %821 = vmatprep.subr.mxu0 0.0
    %822 = vmatpush1.msra.mxu0 0.0
    %823 = vmatprep.subr.mxu0 0.0
    %824 = vmatpush1.msra.mxu0 0.0
    %825 = vmatprep.subr.mxu0 %v758
    %826 = vmatpush1.msra.mxu0 %v757
    %827 = vmatprep.subr.mxu0 %v754
    %828 = vmatpush1.msra.mxu0 %v753
    %829 = vmatprep.subr.mxu0 %v750
    %830 = vmatpush1.msra.mxu0 %v749
    %831 = vmatprep.subr.mxu0 %v746
    %832 = vmatpush1.msra.mxu0 %v745
    %833 = vmatprep.subr.mxu0 0.0
    %834 = vmatpush2.msra.mxu0 0.0
    %835 = vmatprep.subr.mxu0 0.0
    %836 = vmatpush2.msra.mxu0 0.0
    %837 = vmatprep.subr.mxu0 0.0
    %838 = vmatpush2.msra.mxu0 0.0
    %839 = vmatprep.subr.mxu0 0.0
    %840 = vmatpush2.msra.mxu0 0.0
    %841 = vmatprep.subr.mxu0 0.0
    %842 = vmatpush2.msra.mxu0 0.0
    %843 = vmatprep.subr.mxu0 0.0
    %844 = vmatpush2.msra.mxu0 0.0
    %845 = vmatprep.subr.mxu0 0.0
    %846 = vmatpush2.msra.mxu0 0.0
    %847 = vmatprep.subr.mxu0 0.0
    %848 = vmatpush2.msra.mxu0 0.0
    %849 = vmatprep.subr.mxu0 0.0
    %850 = vmatpush2.msra.mxu0 0.0
    %851 = vmatprep.subr.mxu0 0.0
    %852 = vmatpush2.msra.mxu0 0.0
    %853 = vmatprep.subr.mxu0 0.0
    %854 = vmatpush2.msra.mxu0 0.0
    %855 = vmatprep.subr.mxu0 0.0
    %856 = vmatpush2.msra.mxu0 0.0
    %857 = vmatprep.subr.mxu0 0.0
    %858 = vmatpush2.msra.mxu0 0.0
    %859 = vmatprep.subr.mxu0 0.0
    %860 = vmatpush2.msra.mxu0 0.0
    %861 = vmatprep.subr.mxu0 0.0
    %862 = vmatpush2.msra.mxu0 0.0
    %863 = vmatprep.subr.mxu0 0.0
    %864 = vmatpush2.msra.mxu0 0.0
    %865 = vmatprep.mubr.f32.mxu0 0.0
    %866 = vmatmul.mubr.f32.gmra.mxu0 %v790
    %v867 = vpop.f32.mrf.mxu0
    %v868 = vadd.f32 %v772, %v867
    %v869 = vpop.f32.mrf.mxu0
    %v870 = vadd.f32 %v772, %v869
    %871 = vmatprep.mubr.f32.mxu0 0.0
    %872 = vmatmul.mubr.f32.gmra.mxu0 %v793
    %v873 = vpop.f32.mrf.mxu0
    %v874 = vadd.f32 %v777, %v873
    %v875 = vpop.f32.mrf.mxu0
    %v876 = vadd.f32 %v777, %v875
    %877 = vmatprep.mubr.f32.mxu0 0.0
    %878 = vmatmul.mubr.f32.gmra.mxu0 %v796
    %v879 = vpop.f32.mrf.mxu0
    %v880 = vadd.f32 %v782, %v879
    %v881 = vpop.f32.mrf.mxu0
    %v882 = vadd.f32 %v782, %v881
    %883 = vmatprep.mubr.f32.mxu0 0.0
    %884 = vmatmul.mubr.f32.gmra.mxu0 %v799
    %v885 = vpop.f32.mrf.mxu0
    %v886 = vadd.f32 %v787, %v885
    %v887 = vpop.f32.mrf.mxu0
    %v888 = vadd.f32 %v787, %v887
    %889 = vdwg.mxu0
    %890 = vmatprep.subr.mxu0 0.0
    %891 = vmatpush1.msra.mxu0 0.0
    %892 = vmatprep.subr.mxu0 0.0
    %893 = vmatpush1.msra.mxu0 0.0
    %894 = vmatprep.subr.mxu0 0.0
    %895 = vmatpush1.msra.mxu0 0.0
    %896 = vmatprep.subr.mxu0 0.0
    %897 = vmatpush1.msra.mxu0 0.0
    %898 = vmatprep.subr.mxu0 0.0
    %899 = vmatpush1.msra.mxu0 0.0
    %900 = vmatprep.subr.mxu0 0.0
    %901 = vmatpush1.msra.mxu0 0.0
    %902 = vmatprep.subr.mxu0 0.0
    %903 = vmatpush1.msra.mxu0 0.0
    %904 = vmatprep.subr.mxu0 0.0
    %905 = vmatpush1.msra.mxu0 0.0
    %906 = vmatprep.subr.mxu0 0.0
    %907 = vmatpush1.msra.mxu0 0.0
    %908 = vmatprep.subr.mxu0 0.0
    %909 = vmatpush1.msra.mxu0 0.0
    %910 = vmatprep.subr.mxu0 0.0
    %911 = vmatpush1.msra.mxu0 0.0
    %912 = vmatprep.subr.mxu0 0.0
    %913 = vmatpush1.msra.mxu0 0.0
    %914 = vmatprep.subr.mxu0 %v760
    %915 = vmatpush1.msra.mxu0 %v759
    %916 = vmatprep.subr.mxu0 %v756
    %917 = vmatpush1.msra.mxu0 %v755
    %918 = vmatprep.subr.mxu0 %v752
    %919 = vmatpush1.msra.mxu0 %v751
    %920 = vmatprep.subr.mxu0 %v748
    %921 = vmatpush1.msra.mxu0 %v747
    %922 = vmatprep.subr.mxu0 0.0
    %923 = vmatpush2.msra.mxu0 0.0
    %924 = vmatprep.subr.mxu0 0.0
    %925 = vmatpush2.msra.mxu0 0.0
    %926 = vmatprep.subr.mxu0 0.0
    %927 = vmatpush2.msra.mxu0 0.0
    %928 = vmatprep.subr.mxu0 0.0
    %929 = vmatpush2.msra.mxu0 0.0
    %930 = vmatprep.subr.mxu0 0.0
    %931 = vmatpush2.msra.mxu0 0.0
    %932 = vmatprep.subr.mxu0 0.0
    %933 = vmatpush2.msra.mxu0 0.0
    %934 = vmatprep.subr.mxu0 0.0
    %935 = vmatpush2.msra.mxu0 0.0
    %936 = vmatprep.subr.mxu0 0.0
    %937 = vmatpush2.msra.mxu0 0.0
    %938 = vmatprep.subr.mxu0 0.0
    %939 = vmatpush2.msra.mxu0 0.0
    %940 = vmatprep.subr.mxu0 0.0
    %941 = vmatpush2.msra.mxu0 0.0
    %942 = vmatprep.subr.mxu0 0.0
    %943 = vmatpush2.msra.mxu0 0.0
    %944 = vmatprep.subr.mxu0 0.0
    %945 = vmatpush2.msra.mxu0 0.0
    %946 = vmatprep.subr.mxu0 0.0
    %947 = vmatpush2.msra.mxu0 0.0
    %948 = vmatprep.subr.mxu0 0.0
    %949 = vmatpush2.msra.mxu0 0.0
    %950 = vmatprep.subr.mxu0 0.0
    %951 = vmatpush2.msra.mxu0 0.0
    %952 = vmatprep.subr.mxu0 0.0
    %953 = vmatpush2.msra.mxu0 0.0
    %954 = vmatprep.mubr.f32.mxu0 0.0
    %955 = vmatmul.mubr.f32.gmra.mxu0 %v790
    %v956 = vpop.f32.mrf.mxu0
    %v957 = vadd.f32 %v772, %v956
    %v958 = vpop.f32.mrf.mxu0
    %v959 = vadd.f32 %v772, %v958
    %960 = vmatprep.mubr.f32.mxu0 0.0
    %961 = vmatmul.mubr.f32.gmra.mxu0 %v793
    %v962 = vpop.f32.mrf.mxu0
    %v963 = vadd.f32 %v777, %v962
    %v964 = vpop.f32.mrf.mxu0
    %v965 = vadd.f32 %v777, %v964
    %966 = vmatprep.mubr.f32.mxu0 0.0
    %967 = vmatmul.mubr.f32.gmra.mxu0 %v796
    %v968 = vpop.f32.mrf.mxu0
    %v969 = vadd.f32 %v782, %v968
    %v970 = vpop.f32.mrf.mxu0
    %v971 = vadd.f32 %v782, %v970
    %972 = vmatprep.mubr.f32.mxu0 0.0
    %973 = vmatmul.mubr.f32.gmra.mxu0 %v799
    %v974 = vpop.f32.mrf.mxu0
    %v975 = vadd.f32 %v787, %v974
    %v976 = vpop.f32.mrf.mxu0
    %v977 = vadd.f32 %v787, %v976
    %978 = vdwg.mxu0
    %v979 = vmax.f32 %v868, 0.0
    %v980 = vmax.f32 %v870, 0.0
    %v981 = vmax.f32 %v957, 0.0
    %v982 = vmax.f32 %v959, 0.0
    %v983 = vmax.f32 %v874, 0.0
    %v984 = vmax.f32 %v876, 0.0
    %v985 = vmax.f32 %v963, 0.0
    %v986 = vmax.f32 %v965, 0.0
    %v987 = vmax.f32 %v880, 0.0
    %v988 = vmax.f32 %v882, 0.0
    %v989 = vmax.f32 %v969, 0.0
    %v990 = vmax.f32 %v971, 0.0
    %v991 = vmax.f32 %v886, 0.0
    %v992 = vmax.f32 %v888, 0.0
    %v993 = vmax.f32 %v975, 0.0
    %v994 = vmax.f32 %v977, 0.0
    %v995 = vld [vmem:[%s7] sm:$0x1]
    %v996 = vld [vmem:[#allocation2] sm:$0x1]
    %998 = vset.pattern.permute.xlu0 0
    %999 = vperm.xlu0 %998, %v996
    %v1000 = vpop.permute.xlu0 %999
    %v1002 = vlaneseq
    %v1003 = vshrl.u32 %v1002, 7
    %v1004 = vsub.s32 0, %v1003
    %v1005 = vrot.slane %v1000, %v1004
    %v1007 = vsel %vm554, %v995, 0
    %1009 = vmatprep.subr.mxu0 0.0
    %1010 = vmatpush1.msra.mxu0 0.0
    %1011 = vmatprep.subr.mxu0 0.0
    %1012 = vmatpush1.msra.mxu0 0.0
    %1013 = vmatprep.subr.mxu0 0.0
    %1014 = vmatpush1.msra.mxu0 0.0
    %1015 = vmatprep.subr.mxu0 0.0
    %1016 = vmatpush1.msra.mxu0 0.0
    %1017 = vmatprep.subr.mxu0 0.0
    %1018 = vmatpush1.msra.mxu0 0.0
    %1019 = vmatprep.subr.mxu0 0.0
    %1020 = vmatpush1.msra.mxu0 0.0
    %1021 = vmatprep.subr.mxu0 0.0
    %1022 = vmatpush1.msra.mxu0 0.0
    %1023 = vmatprep.subr.mxu0 0.0
    %1024 = vmatpush1.msra.mxu0 0.0
    %1025 = vmatprep.subr.mxu0 0.0
    %1026 = vmatpush1.msra.mxu0 0.0
    %1027 = vmatprep.subr.mxu0 0.0
    %1028 = vmatpush1.msra.mxu0 0.0
    %1029 = vmatprep.subr.mxu0 0.0
    %1030 = vmatpush1.msra.mxu0 0.0
    %1031 = vmatprep.subr.mxu0 0.0
    %1032 = vmatpush1.msra.mxu0 0.0
    %1033 = vmatprep.subr.mxu0 %v992
    %1034 = vmatpush1.msra.mxu0 %v991
    %1035 = vmatprep.subr.mxu0 %v988
    %1036 = vmatpush1.msra.mxu0 %v987
    %1037 = vmatprep.subr.mxu0 %v984
    %1038 = vmatpush1.msra.mxu0 %v983
    %1039 = vmatprep.subr.mxu0 %v980
    %1040 = vmatpush1.msra.mxu0 %v979
    %1041 = vmatprep.subr.mxu0 0.0
    %1042 = vmatpush2.msra.mxu0 0.0
    %1043 = vmatprep.subr.mxu0 0.0
    %1044 = vmatpush2.msra.mxu0 0.0
    %1045 = vmatprep.subr.mxu0 0.0
    %1046 = vmatpush2.msra.mxu0 0.0
    %1047 = vmatprep.subr.mxu0 0.0
    %1048 = vmatpush2.msra.mxu0 0.0
    %1049 = vmatprep.subr.mxu0 0.0
    %1050 = vmatpush2.msra.mxu0 0.0
    %1051 = vmatprep.subr.mxu0 0.0
    %1052 = vmatpush2.msra.mxu0 0.0
    %1053 = vmatprep.subr.mxu0 0.0
    %1054 = vmatpush2.msra.mxu0 0.0
    %1055 = vmatprep.subr.mxu0 0.0
    %1056 = vmatpush2.msra.mxu0 0.0
    %1057 = vmatprep.subr.mxu0 0.0
    %1058 = vmatpush2.msra.mxu0 0.0
    %1059 = vmatprep.subr.mxu0 0.0
    %1060 = vmatpush2.msra.mxu0 0.0
    %1061 = vmatprep.subr.mxu0 0.0
    %1062 = vmatpush2.msra.mxu0 0.0
    %1063 = vmatprep.subr.mxu0 0.0
    %1064 = vmatpush2.msra.mxu0 0.0
    %1065 = vmatprep.subr.mxu0 0.0
    %1066 = vmatpush2.msra.mxu0 0.0
    %1067 = vmatprep.subr.mxu0 0.0
    %1068 = vmatpush2.msra.mxu0 0.0
    %1069 = vmatprep.subr.mxu0 0.0
    %1070 = vmatpush2.msra.mxu0 0.0
    %1071 = vmatprep.subr.mxu0 0.0
    %1072 = vmatpush2.msra.mxu0 0.0
    %1073 = vmatprep.mubr.f32.mxu0 0.0
    %1074 = vmatmul.mubr.f32.gmra.mxu0 %v1007
    %v1075 = vpop.f32.mrf.mxu0
    %v1076 = vadd.f32 %v1005, %v1075
    %v1077 = vpop.f32.mrf.mxu0
    %v1078 = vadd.f32 %v1005, %v1077
    %1079 = vdwg.mxu0
    %1080 = vmatprep.subr.mxu0 0.0
    %1081 = vmatpush1.msra.mxu0 0.0
    %1082 = vmatprep.subr.mxu0 0.0
    %1083 = vmatpush1.msra.mxu0 0.0
    %1084 = vmatprep.subr.mxu0 0.0
    %1085 = vmatpush1.msra.mxu0 0.0
    %1086 = vmatprep.subr.mxu0 0.0
    %1087 = vmatpush1.msra.mxu0 0.0
    %1088 = vmatprep.subr.mxu0 0.0
    %1089 = vmatpush1.msra.mxu0 0.0
    %1090 = vmatprep.subr.mxu0 0.0
    %1091 = vmatpush1.msra.mxu0 0.0
    %1092 = vmatprep.subr.mxu0 0.0
    %1093 = vmatpush1.msra.mxu0 0.0
    %1094 = vmatprep.subr.mxu0 0.0
    %1095 = vmatpush1.msra.mxu0 0.0
    %1096 = vmatprep.subr.mxu0 0.0
    %1097 = vmatpush1.msra.mxu0 0.0
    %1098 = vmatprep.subr.mxu0 0.0
    %1099 = vmatpush1.msra.mxu0 0.0
    %1100 = vmatprep.subr.mxu0 0.0
    %1101 = vmatpush1.msra.mxu0 0.0
    %1102 = vmatprep.subr.mxu0 0.0
    %1103 = vmatpush1.msra.mxu0 0.0
    %1104 = vmatprep.subr.mxu0 %v994
    %1105 = vmatpush1.msra.mxu0 %v993
    %1106 = vmatprep.subr.mxu0 %v990
    %1107 = vmatpush1.msra.mxu0 %v989
    %1108 = vmatprep.subr.mxu0 %v986
    %1109 = vmatpush1.msra.mxu0 %v985
    %1110 = vmatprep.subr.mxu0 %v982
    %1111 = vmatpush1.msra.mxu0 %v981
    %1112 = vmatprep.subr.mxu0 0.0
    %1113 = vmatpush2.msra.mxu0 0.0
    %1114 = vmatprep.subr.mxu0 0.0
    %1115 = vmatpush2.msra.mxu0 0.0
    %1116 = vmatprep.subr.mxu0 0.0
    %1117 = vmatpush2.msra.mxu0 0.0
    %1118 = vmatprep.subr.mxu0 0.0
    %1119 = vmatpush2.msra.mxu0 0.0
    %1120 = vmatprep.subr.mxu0 0.0
    %1121 = vmatpush2.msra.mxu0 0.0
    %1122 = vmatprep.subr.mxu0 0.0
    %1123 = vmatpush2.msra.mxu0 0.0
    %1124 = vmatprep.subr.mxu0 0.0
    %1125 = vmatpush2.msra.mxu0 0.0
    %1126 = vmatprep.subr.mxu0 0.0
    %1127 = vmatpush2.msra.mxu0 0.0
    %1128 = vmatprep.subr.mxu0 0.0
    %1129 = vmatpush2.msra.mxu0 0.0
    %1130 = vmatprep.subr.mxu0 0.0
    %1131 = vmatpush2.msra.mxu0 0.0
    %1132 = vmatprep.subr.mxu0 0.0
    %1133 = vmatpush2.msra.mxu0 0.0
    %1134 = vmatprep.subr.mxu0 0.0
    %1135 = vmatpush2.msra.mxu0 0.0
    %1136 = vmatprep.subr.mxu0 0.0
    %1137 = vmatpush2.msra.mxu0 0.0
    %1138 = vmatprep.subr.mxu0 0.0
    %1139 = vmatpush2.msra.mxu0 0.0
    %1140 = vmatprep.subr.mxu0 0.0
    %1141 = vmatpush2.msra.mxu0 0.0
    %1142 = vmatprep.subr.mxu0 0.0
    %1143 = vmatpush2.msra.mxu0 0.0
    %1144 = vmatprep.mubr.f32.mxu0 0.0
    %1145 = vmatmul.mubr.f32.gmra.mxu0 %v1007
    %v1146 = vpop.f32.mrf.mxu0
    %v1147 = vadd.f32 %v1005, %v1146
    %v1148 = vpop.f32.mrf.mxu0
    %v1149 = vadd.f32 %v1005, %v1148
    %1150 = vdwg.mxu0
    %v1155 = vcombine.low %v1076, %v1078
    %v1156 = vcombine.low %v1147, %v1149
    %v1158 = vunpack.c.l.s4 1966171168
    %v1159 = vunpack.c.0.s8 %v1158
    %v1160 = vlaneseq
    %v1161 = vshrl.u32 %v1160, 7
    %v1162 = vsub.s32 %v1159, %v1161
    %v1163 = vrot.slane %v1155, %v1162
    %v1165 = vunpack.c.l.s4 1966171168
    %v1166 = vunpack.c.0.s8 %v1165
    %v1167 = vlaneseq
    %v1168 = vshrl.u32 %v1167, 7
    %v1169 = vsub.s32 %v1166, %v1168
    %v1170 = vrot.slane %v1156, %v1169
    %v1171 = vcombine.low %v1163, %v1170
    %v1173 = vunpack.c.l.s4 1966171168
    %v1174 = vunpack.c.0.s8 %v1173
    %v1175 = vlaneseq
    %v1176 = vshrl.u32 %v1175, 7
    %v1177 = vsub.s32 %v1174, %v1176
    %v1178 = vrot.slane %v1171, %v1177
    %v1180 = vlaneseq
    %vm1181 = vcmp.ge.s32.totalorder %v1180, 0
    %vm1182 = vcmp.lt.s32.totalorder %v1180, 512
    %vm1183 = vmand %vm1181, %vm1182
    %1184 = vst.msk [vmem:[#allocation3] sm:$0xf] %vm1183, %v1178
    // Predicated region
    $region38: #{tpu_custom_call.1} parent=1 // pred_check
      _
    $region39: #{tpu_custom_call.1} parent=1 // pred_check_branch
      %1186 = sbr.rel (0) target = $region41
    $region40: #{tpu_custom_call.1} parent=1 // pred_region
      %s1188 = ssub.s32 64, 64
      %1189 = vsyncadd [#allocation4], %s1188
      %s1191 = sshll.u32 [#allocation3], 4
      %s1192 = int_to_ptr.vmem [resolvable:$true] %s1191
      %1194 = dma.vmem_to_hbm [thread:$0]  %s1192, 64, %s9, [#allocation4]
    $region41: #{tpu_custom_call.1} parent=1 // pred_fallthru
      _
    // Predicated region
    $region42: #{tpu_custom_call.1} parent=1 // pred_check
      _
    $region43: #{tpu_custom_call.1} parent=1 // pred_check_branch
      %1196 = sbr.rel (0) target = $region45
    $region44: #{tpu_custom_call.1} parent=1 // pred_region
      %1197 = dma.done [#allocation4], 64
    $region45: #{tpu_custom_call.1} parent=1 // pred_fallthru
      _
    %1198 = vsyncpa [#allocation4], 1

</llo_original>
